<compile_context>
chip_gen: v7x
topology: tpu7x:2x2x1
jax: 0.10.0
libtpu: 0.0.40
codegen_flags: <defaults>
</compile_context>

<pallas_src>
import functools

import jax
import jax.numpy as jnp
import numpy as np
from jax import lax
from jax.experimental import pallas as pl
from jax.experimental.pallas import tpu as pltpu


def _resblock_kernel(x_ref, w1_ref, b1_ref, w2_ref, b2_ref, out_ref,
                     hal_ref, col_ref, *, H, W, PAD):
    # x_ref  : (1, C, L)              un-haloed flattened input (this batch element)
    # w*_ref : (C, 9*C) bf16          conv weights packed as [co, (kh*3+kw)*C + ci]
    # b*_ref : (C, 1)  f32            biases
    # out_ref: (1, C, L)
    # hal_ref: (C, PAD + L + PAD) f32 VMEM scratch: zero-haloed activation (x, then h1)
    # col_ref: (9*C, L) f32           VMEM scratch: im2col stack of the 9 tap windows
    L = H * W
    C = out_ref.shape[1]

    x = x_ref[0]                                              # (C, L) f32, residual input

    # W-boundary masks, built directly at (C, L) so the broadcast is materialised
    # exactly once per grid step (JAX does not CSE broadcast_in_dim).
    w_idx = lax.broadcasted_iota(jnp.int32, (C, L), 1) % W
    mask_l = w_idx >= 1                                       # column w-1 exists
    mask_r = w_idx <= W - 2                                   # column w+1 exists

    # Zero the halo (aligned, lane-dense stores: PAD and PAD+L are multiples of
    # 128).  Only the core [PAD:PAD+L] is ever overwritten afterwards, so the
    # halo stays zero for both convs.  Re-done every grid step so correctness
    # is independent of grid-step ordering across cores.
    hal_ref[:, :PAD] = jnp.zeros((C, PAD), jnp.float32)
    hal_ref[:, PAD + L:] = jnp.zeros((C, PAD), jnp.float32)

    def conv3x3(w_bf16, b):
        """3x3 'SAME' conv over hal_ref's core: im2col the 9 shifted windows into
        col_ref, then a single (C,9C) @ (9C,L) bf16 MXU matmul, f32 accumulation."""
        tap = 0
        for dr in (-1, 0, 1):
            for dc in (-1, 0, 1):
                s = dr * W + dc
                patch = hal_ref[:, PAD + s:PAD + s + L]       # (C, L), H halo = zeros
                if dc == -1:
                    patch = jnp.where(mask_l, patch, 0.0)
                elif dc == 1:
                    patch = jnp.where(mask_r, patch, 0.0)
                col_ref[tap * C:(tap + 1) * C, :] = patch
                tap += 1
        col = col_ref[...].astype(jnp.bfloat16)               # (9C, L), one cast
        return jnp.dot(w_bf16, col,                           # MXU, f32 accumulate
                       preferred_element_type=jnp.float32) + b

    w1 = w1_ref[...]                                          # (C, 9*C) bf16, one load each
    w2 = w2_ref[...]
    b1 = b1_ref[...]                                          # (C, 1) f32, lane-broadcast add
    b2 = b2_ref[...]

    # ---- conv1 + bias + ReLU ----
    hal_ref[:, PAD:PAD + L] = x
    h1 = jnp.maximum(conv3x3(w1, b1), 0.0)                    # (C, L) f32

    # ---- conv2 + bias, residual add, ReLU (reuse the same haloed scratch) ----
    hal_ref[:, PAD:PAD + L] = h1
    y = conv3x3(w2, b2)
    out_ref[0] = jnp.maximum(x + y, 0.0).astype(out_ref.dtype)


def _pack_conv_weight(w_oihw):
    """PyTorch OIHW (Cout, Cin, 3, 3) weight -> flat tap slab (Cout, 9*Cin),
    row order matching the im2col stack: index = ((kh*3 + kw) * Cin + ci)."""
    cout, cin, kh, kw = w_oihw.shape
    return jnp.transpose(w_oihw, (0, 2, 3, 1)).reshape(cout, kh * kw * cin)


@jax.jit
def unary_module_forward(x_nchw, w1, b1, w2, b2):
    """x_nchw: (N, C, H, W) float32 (PyTorch layout). Returns (out, saved_map)."""
    N, C, H, W = x_nchw.shape
    L = H * W
    PAD = ((W + 1 + 127) // 128) * 128      # in-VMEM lane halo: >= W+1 and 128-aligned

    x_flat = x_nchw.reshape(N, C, L)        # no HBM-side padding; halo is built in VMEM
    w1_p = _pack_conv_weight(w1).astype(jnp.bfloat16)
    w2_p = _pack_conv_weight(w2).astype(jnp.bfloat16)
    b1_c = b1.reshape(C, 1)
    b2_c = b2.reshape(C, 1)

    out_flat = pl.pallas_call(
        functools.partial(_resblock_kernel, H=H, W=W, PAD=PAD),
        out_shape=jax.ShapeDtypeStruct((N, C, L), x_nchw.dtype),
        grid_spec=pltpu.PrefetchScalarGridSpec(
            num_scalar_prefetch=0,
            grid=(N,),
            in_specs=[
                pl.BlockSpec((1, C, L), lambda n: (n, 0, 0)),
                pl.BlockSpec((C, 9 * C), lambda n: (0, 0)),
                pl.BlockSpec((C, 1), lambda n: (0, 0)),
                pl.BlockSpec((C, 9 * C), lambda n: (0, 0)),
                pl.BlockSpec((C, 1), lambda n: (0, 0)),
            ],
            out_specs=pl.BlockSpec((1, C, L), lambda n: (n, 0, 0)),
            scratch_shapes=[
                pltpu.VMEM((C, L + 2 * PAD), jnp.float32),   # haloed activation
                pltpu.VMEM((9 * C, L), jnp.float32),         # im2col stack
            ],
        ),
        compiler_params=pltpu.CompilerParams(
            dimension_semantics=("parallel",)),
    )(x_flat, w1_p, b1_c, w2_p, b2_c)

    out = out_flat.reshape(N, C, H, W)
    # Mirrors the torch module's `self.saved_map = out[0]` / `get_map()`.
    saved_map = out[0]
    return out, saved_map


def _reference(x, w1, b1, w2, b2):
    dn = ("NCHW", "OIHW", "NCHW")
    prec = lax.Precision.HIGHEST
    h = lax.conv_general_dilated(x, w1, (1, 1), "SAME",
                                 dimension_numbers=dn, precision=prec)
    h = jnp.maximum(h + b1[None, :, None, None], 0.0)
    o = lax.conv_general_dilated(h, w2, (1, 1), "SAME",
                                 dimension_numbers=dn, precision=prec)
    o = o + b2[None, :, None, None]
    return jnp.maximum(x + o, 0.0)


if __name__ == "__main__":
    # num_input == num_output, as required by the module's residual add.
    N, C, H, W = 2, 4, 16, 16

    key = jax.random.PRNGKey(0)
    kx, kw1, kb1, kw2, kb2 = jax.random.split(key, 5)

    # nn.Conv2d-style init (uniform +-1/sqrt(fan_in)); weights in PyTorch OIHW layout.
    fan_in = C * 3 * 3
    bound = 1.0 / np.sqrt(fan_in)
    w1 = jax.random.uniform(kw1, (C, C, 3, 3), jnp.float32, -bound, bound)
    b1 = jax.random.uniform(kb1, (C,), jnp.float32, -bound, bound)
    w2 = jax.random.uniform(kw2, (C, C, 3, 3), jnp.float32, -bound, bound)
    b2 = jax.random.uniform(kb2, (C,), jnp.float32, -bound, bound)

    x = jax.random.normal(kx, (N, C, H, W), jnp.float32)     # NCHW, PyTorch convention

    out, saved_map = unary_module_forward(x, w1, b1, w2, b2)
    out = jax.block_until_ready(out)

    ref = _reference(x, w1, b1, w2, b2)
    # Tolerance documents the deliberate choice of bf16 MXU operands
    # (f32 accumulation): expected abs error is a few 1e-3 at these magnitudes;
    # any structural bug (wrong shift/mask/weight packing) produces O(1) errors.
    np.testing.assert_allclose(np.asarray(out), np.asarray(ref),
                               rtol=2e-2, atol=2e-2)
    assert saved_map.shape == (C, H, W)

    print("KERNEL_OK")
</pallas_src>

<mosaic_0001>
module attributes {stable_mosaic.version = 11 : i64} {
  func.func @_resblock_kernel(%arg0: i32, %arg1: memref<1x4x256xf32, #tpu.memory_space<vmem>>, %arg2: memref<4x36xbf16, #tpu.memory_space<vmem>>, %arg3: memref<4x1xf32, #tpu.memory_space<vmem>>, %arg4: memref<4x36xbf16, #tpu.memory_space<vmem>>, %arg5: memref<4x1xf32, #tpu.memory_space<vmem>>, %arg6: memref<1x4x256xf32, #tpu.memory_space<vmem>>, %arg7: memref<4x512xf32, #tpu.memory_space<vmem>>, %arg8: memref<36x256xf32, #tpu.memory_space<vmem>>) attributes {dimension_semantics = [#tpu.dimension_semantics<parallel>], iteration_bounds = array<i64: 2>, scalar_prefetch = 0 : i64, scratch_operands = 2 : i64, tpu.core_type = #tpu.core_type<tc>, window_params = [{transform_indices = @transform_0, window_bounds = array<i64: 1, 4, 256>}, {pipeline_mode = #tpu.pipeline_mode<synchronous>, transform_indices = @transform_1, window_bounds = array<i64: 4, 36>}, {pipeline_mode = #tpu.pipeline_mode<synchronous>, transform_indices = @transform_2, window_bounds = array<i64: 4, 1>}, {pipeline_mode = #tpu.pipeline_mode<synchronous>, transform_indices = @transform_3, window_bounds = array<i64: 4, 36>}, {pipeline_mode = #tpu.pipeline_mode<synchronous>, transform_indices = @transform_4, window_bounds = array<i64: 4, 1>}, {transform_indices = @transform_5, window_bounds = array<i64: 1, 4, 256>}]} {
    %c0 = arith.constant 0 : index
    %c0_0 = arith.constant 0 : index
    %c0_1 = arith.constant 0 : index
    %0 = vector.load %arg1[%c0, %c0_0, %c0_1] : memref<1x4x256xf32, #tpu.memory_space<vmem>>, vector<1x4x256xf32>
    %1 = vector.shape_cast %0 : vector<1x4x256xf32> to vector<4x256xf32>
    %2 = tpu.iota {dimensions = array<i32: 1>} : vector<4x256xi32>
    %c16_i32 = arith.constant 16 : i32
    %c0_i32 = arith.constant 0 : i32
    %3 = arith.cmpi eq, %c16_i32, %c0_i32 : i32
    %c1_i32 = arith.constant 1 : i32
    %4 = arith.select %3, %c1_i32, %c16_i32 : i32
    %5 = vector.broadcast %4 : i32 to vector<4x256xi32>
    %6 = arith.remsi %2, %5 : vector<4x256xi32>
    %c0_i32_2 = arith.constant 0 : i32
    %7 = vector.broadcast %c0_i32_2 : i32 to vector<4x256xi32>
    %8 = arith.cmpi ne, %6, %7 : vector<4x256xi32>
    %c0_i32_3 = arith.constant 0 : i32
    %9 = vector.broadcast %c0_i32_3 : i32 to vector<4x256xi32>
    %10 = arith.cmpi slt, %6, %9 : vector<4x256xi32>
    %c0_i32_4 = arith.constant 0 : i32
    %11 = arith.cmpi slt, %4, %c0_i32_4 : i32
    %12 = vector.broadcast %11 : i1 to vector<4x256xi1>
    %13 = vector.broadcast %12 : vector<4x256xi1> to vector<4x256xi1>
    %14 = arith.xori %10, %13 : vector<4x256xi1>
    %15 = arith.andi %14, %8 : vector<4x256xi1>
    %16 = vector.broadcast %4 : i32 to vector<4x256xi32>
    %17 = arith.addi %6, %16 : vector<4x256xi32>
    %18 = arith.select %15, %17, %6 : vector<4x256xi1>, vector<4x256xi32>
    %c1_i32_5 = arith.constant 1 : i32
    %19 = vector.broadcast %c1_i32_5 : i32 to vector<4x256xi32>
    %20 = arith.cmpi sge, %18, %19 : vector<4x256xi32>
    %c14_i32 = arith.constant 14 : i32
    %21 = vector.broadcast %c14_i32 : i32 to vector<4x256xi32>
    %22 = arith.cmpi sle, %18, %21 : vector<4x256xi32>
    %cst = arith.constant 0.000000e+00 : f32
    %23 = vector.broadcast %cst : f32 to vector<4x128xf32>
    %c0_6 = arith.constant 0 : index
    %c0_7 = arith.constant 0 : index
    %24 = vector.load %arg7[%c0_6, %c0_7] : memref<4x512xf32, #tpu.memory_space<vmem>>, vector<4x128xf32>
    tpu.vector_store %arg7[%c0_6, %c0_7], %23 {strides = array<i32>} : memref<4x512xf32, #tpu.memory_space<vmem>>, vector<4x128xf32>,
    %cst_8 = arith.constant 0.000000e+00 : f32
    %25 = vector.broadcast %cst_8 : f32 to vector<4x128xf32>
    %c0_9 = arith.constant 0 : index
    %c384 = arith.constant 384 : index
    %26 = vector.load %arg7[%c0_9, %c384] : memref<4x512xf32, #tpu.memory_space<vmem>>, vector<4x128xf32>
    tpu.vector_store %arg7[%c0_9, %c384], %25 {strides = array<i32>} : memref<4x512xf32, #tpu.memory_space<vmem>>, vector<4x128xf32>,
    %c0_10 = arith.constant 0 : index
    %c0_11 = arith.constant 0 : index
    %27 = vector.load %arg2[%c0_10, %c0_11] : memref<4x36xbf16, #tpu.memory_space<vmem>>, vector<4x36xbf16>
    %c0_12 = arith.constant 0 : index
    %c0_13 = arith.constant 0 : index
    %28 = vector.load %arg4[%c0_12, %c0_13] : memref<4x36xbf16, #tpu.memory_space<vmem>>, vector<4x36xbf16>
    %c0_14 = arith.constant 0 : index
    %c0_15 = arith.constant 0 : index
    %29 = vector.load %arg3[%c0_14, %c0_15] : memref<4x1xf32, #tpu.memory_space<vmem>>, vector<4x1xf32>
    %c0_16 = arith.constant 0 : index
    %c0_17 = arith.constant 0 : index
    %30 = vector.load %arg5[%c0_16, %c0_17] : memref<4x1xf32, #tpu.memory_space<vmem>>, vector<4x1xf32>
    %c0_18 = arith.constant 0 : index
    %c128 = arith.constant 128 : index
    %31 = vector.load %arg7[%c0_18, %c128] : memref<4x512xf32, #tpu.memory_space<vmem>>, vector<4x256xf32>
    tpu.vector_store %arg7[%c0_18, %c128], %1 {strides = array<i32>} : memref<4x512xf32, #tpu.memory_space<vmem>>, vector<4x256xf32>,
    %c0_19 = arith.constant 0 : index
    %c111 = arith.constant 111 : index
    %32 = vector.load %arg7[%c0_19, %c111] : memref<4x512xf32, #tpu.memory_space<vmem>>, vector<4x256xf32>
    %cst_20 = arith.constant 0.000000e+00 : f32
    %33 = vector.broadcast %cst_20 : f32 to vector<4x256xf32>
    %34 = arith.select %20, %32, %33 : vector<4x256xi1>, vector<4x256xf32>
    %c0_21 = arith.constant 0 : index
    %c0_22 = arith.constant 0 : index
    %35 = vector.load %arg8[%c0_21, %c0_22] : memref<36x256xf32, #tpu.memory_space<vmem>>, vector<4x256xf32>
    tpu.vector_store %arg8[%c0_21, %c0_22], %34 {strides = array<i32>} : memref<36x256xf32, #tpu.memory_space<vmem>>, vector<4x256xf32>,
    %c0_23 = arith.constant 0 : index
    %c112 = arith.constant 112 : index
    %36 = vector.load %arg7[%c0_23, %c112] : memref<4x512xf32, #tpu.memory_space<vmem>>, vector<4x256xf32>
    %c4 = arith.constant 4 : index
    %c0_24 = arith.constant 0 : index
    %37 = vector.load %arg8[%c4, %c0_24] : memref<36x256xf32, #tpu.memory_space<vmem>>, vector<4x256xf32>
    tpu.vector_store %arg8[%c4, %c0_24], %36 {strides = array<i32>} : memref<36x256xf32, #tpu.memory_space<vmem>>, vector<4x256xf32>,
    %c0_25 = arith.constant 0 : index
    %c113 = arith.constant 113 : index
    %38 = vector.load %arg7[%c0_25, %c113] : memref<4x512xf32, #tpu.memory_space<vmem>>, vector<4x256xf32>
    %cst_26 = arith.constant 0.000000e+00 : f32
    %39 = vector.broadcast %cst_26 : f32 to vector<4x256xf32>
    %40 = arith.select %22, %38, %39 : vector<4x256xi1>, vector<4x256xf32>
    %c8 = arith.constant 8 : index
    %c0_27 = arith.constant 0 : index
    %41 = vector.load %arg8[%c8, %c0_27] : memref<36x256xf32, #tpu.memory_space<vmem>>, vector<4x256xf32>
    tpu.vector_store %arg8[%c8, %c0_27], %40 {strides = array<i32>} : memref<36x256xf32, #tpu.memory_space<vmem>>, vector<4x256xf32>,
    %c0_28 = arith.constant 0 : index
    %c127 = arith.constant 127 : index
    %42 = vector.load %arg7[%c0_28, %c127] : memref<4x512xf32, #tpu.memory_space<vmem>>, vector<4x256xf32>
    %cst_29 = arith.constant 0.000000e+00 : f32
    %43 = vector.broadcast %cst_29 : f32 to vector<4x256xf32>
    %44 = arith.select %20, %42, %43 : vector<4x256xi1>, vector<4x256xf32>
    %c12 = arith.constant 12 : index
    %c0_30 = arith.constant 0 : index
    %45 = vector.load %arg8[%c12, %c0_30] : memref<36x256xf32, #tpu.memory_space<vmem>>, vector<4x256xf32>
    tpu.vector_store %arg8[%c12, %c0_30], %44 {strides = array<i32>} : memref<36x256xf32, #tpu.memory_space<vmem>>, vector<4x256xf32>,
    %c0_31 = arith.constant 0 : index
    %c128_32 = arith.constant 128 : index
    %46 = vector.load %arg7[%c0_31, %c128_32] : memref<4x512xf32, #tpu.memory_space<vmem>>, vector<4x256xf32>
    %c16 = arith.constant 16 : index
    %c0_33 = arith.constant 0 : index
    %47 = vector.load %arg8[%c16, %c0_33] : memref<36x256xf32, #tpu.memory_space<vmem>>, vector<4x256xf32>
    tpu.vector_store %arg8[%c16, %c0_33], %46 {strides = array<i32>} : memref<36x256xf32, #tpu.memory_space<vmem>>, vector<4x256xf32>,
    %c0_34 = arith.constant 0 : index
    %c129 = arith.constant 129 : index
    %48 = vector.load %arg7[%c0_34, %c129] : memref<4x512xf32, #tpu.memory_space<vmem>>, vector<4x256xf32>
    %cst_35 = arith.constant 0.000000e+00 : f32
    %49 = vector.broadcast %cst_35 : f32 to vector<4x256xf32>
    %50 = arith.select %22, %48, %49 : vector<4x256xi1>, vector<4x256xf32>
    %c20 = arith.constant 20 : index
    %c0_36 = arith.constant 0 : index
    %51 = vector.load %arg8[%c20, %c0_36] : memref<36x256xf32, #tpu.memory_space<vmem>>, vector<4x256xf32>
    tpu.vector_store %arg8[%c20, %c0_36], %50 {strides = array<i32>} : memref<36x256xf32, #tpu.memory_space<vmem>>, vector<4x256xf32>,
    %c0_37 = arith.constant 0 : index
    %c143 = arith.constant 143 : index
    %52 = vector.load %arg7[%c0_37, %c143] : memref<4x512xf32, #tpu.memory_space<vmem>>, vector<4x256xf32>
    %cst_38 = arith.constant 0.000000e+00 : f32
    %53 = vector.broadcast %cst_38 : f32 to vector<4x256xf32>
    %54 = arith.select %20, %52, %53 : vector<4x256xi1>, vector<4x256xf32>
    %c24 = arith.constant 24 : index
    %c0_39 = arith.constant 0 : index
    %55 = vector.load %arg8[%c24, %c0_39] : memref<36x256xf32, #tpu.memory_space<vmem>>, vector<4x256xf32>
    tpu.vector_store %arg8[%c24, %c0_39], %54 {strides = array<i32>} : memref<36x256xf32, #tpu.memory_space<vmem>>, vector<4x256xf32>,
    %c0_40 = arith.constant 0 : index
    %c144 = arith.constant 144 : index
    %56 = vector.load %arg7[%c0_40, %c144] : memref<4x512xf32, #tpu.memory_space<vmem>>, vector<4x256xf32>
    %c28 = arith.constant 28 : index
    %c0_41 = arith.constant 0 : index
    %57 = vector.load %arg8[%c28, %c0_41] : memref<36x256xf32, #tpu.memory_space<vmem>>, vector<4x256xf32>
    tpu.vector_store %arg8[%c28, %c0_41], %56 {strides = array<i32>} : memref<36x256xf32, #tpu.memory_space<vmem>>, vector<4x256xf32>,
    %c0_42 = arith.constant 0 : index
    %c145 = arith.constant 145 : index
    %58 = vector.load %arg7[%c0_42, %c145] : memref<4x512xf32, #tpu.memory_space<vmem>>, vector<4x256xf32>
    %cst_43 = arith.constant 0.000000e+00 : f32
    %59 = vector.broadcast %cst_43 : f32 to vector<4x256xf32>
    %60 = arith.select %22, %58, %59 : vector<4x256xi1>, vector<4x256xf32>
    %c32 = arith.constant 32 : index
    %c0_44 = arith.constant 0 : index
    %61 = vector.load %arg8[%c32, %c0_44] : memref<36x256xf32, #tpu.memory_space<vmem>>, vector<4x256xf32>
    tpu.vector_store %arg8[%c32, %c0_44], %60 {strides = array<i32>} : memref<36x256xf32, #tpu.memory_space<vmem>>, vector<4x256xf32>,
    %c0_45 = arith.constant 0 : index
    %c0_46 = arith.constant 0 : index
    %62 = vector.load %arg8[%c0_45, %c0_46] : memref<36x256xf32, #tpu.memory_space<vmem>>, vector<36x256xf32>
    %63 = arith.truncf %62 : vector<36x256xf32> to vector<36x256xbf16>
    %cst_47 = arith.constant dense<0.000000e+00> : vector<4x256xf32>
    %64 = tpu.matmul %27, %63, %cst_47 {dimension_numbers = #tpu.dot_dimension_numbers<[1], [0], [0], [1], [0, 0, 1, 1], [], []>} : vector<4x36xbf16>, vector<36x256xbf16>, vector<4x256xf32> -> vector<4x256xf32>
    %65 = vector.broadcast %29 : vector<4x1xf32> to vector<4x256xf32>
    %66 = arith.addf %64, %65 : vector<4x256xf32>
    %cst_48 = arith.constant 0.000000e+00 : f32
    %67 = vector.broadcast %cst_48 : f32 to vector<4x256xf32>
    %68 = arith.maximumf %66, %67 : vector<4x256xf32>
    %c0_49 = arith.constant 0 : index
    %c128_50 = arith.constant 128 : index
    %69 = vector.load %arg7[%c0_49, %c128_50] : memref<4x512xf32, #tpu.memory_space<vmem>>, vector<4x256xf32>
    tpu.vector_store %arg7[%c0_49, %c128_50], %68 {strides = array<i32>} : memref<4x512xf32, #tpu.memory_space<vmem>>, vector<4x256xf32>,
    %c0_51 = arith.constant 0 : index
    %c111_52 = arith.constant 111 : index
    %70 = vector.load %arg7[%c0_51, %c111_52] : memref<4x512xf32, #tpu.memory_space<vmem>>, vector<4x256xf32>
    %cst_53 = arith.constant 0.000000e+00 : f32
    %71 = vector.broadcast %cst_53 : f32 to vector<4x256xf32>
    %72 = arith.select %20, %70, %71 : vector<4x256xi1>, vector<4x256xf32>
    %c0_54 = arith.constant 0 : index
    %c0_55 = arith.constant 0 : index
    %73 = vector.load %arg8[%c0_54, %c0_55] : memref<36x256xf32, #tpu.memory_space<vmem>>, vector<4x256xf32>
    tpu.vector_store %arg8[%c0_54, %c0_55], %72 {strides = array<i32>} : memref<36x256xf32, #tpu.memory_space<vmem>>, vector<4x256xf32>,
    %c0_56 = arith.constant 0 : index
    %c112_57 = arith.constant 112 : index
    %74 = vector.load %arg7[%c0_56, %c112_57] : memref<4x512xf32, #tpu.memory_space<vmem>>, vector<4x256xf32>
    %c4_58 = arith.constant 4 : index
    %c0_59 = arith.constant 0 : index
    %75 = vector.load %arg8[%c4_58, %c0_59] : memref<36x256xf32, #tpu.memory_space<vmem>>, vector<4x256xf32>
    tpu.vector_store %arg8[%c4_58, %c0_59], %74 {strides = array<i32>} : memref<36x256xf32, #tpu.memory_space<vmem>>, vector<4x256xf32>,
    %c0_60 = arith.constant 0 : index
    %c113_61 = arith.constant 113 : index
    %76 = vector.load %arg7[%c0_60, %c113_61] : memref<4x512xf32, #tpu.memory_space<vmem>>, vector<4x256xf32>
    %cst_62 = arith.constant 0.000000e+00 : f32
    %77 = vector.broadcast %cst_62 : f32 to vector<4x256xf32>
    %78 = arith.select %22, %76, %77 : vector<4x256xi1>, vector<4x256xf32>
    %c8_63 = arith.constant 8 : index
    %c0_64 = arith.constant 0 : index
    %79 = vector.load %arg8[%c8_63, %c0_64] : memref<36x256xf32, #tpu.memory_space<vmem>>, vector<4x256xf32>
    tpu.vector_store %arg8[%c8_63, %c0_64], %78 {strides = array<i32>} : memref<36x256xf32, #tpu.memory_space<vmem>>, vector<4x256xf32>,
    %c0_65 = arith.constant 0 : index
    %c127_66 = arith.constant 127 : index
    %80 = vector.load %arg7[%c0_65, %c127_66] : memref<4x512xf32, #tpu.memory_space<vmem>>, vector<4x256xf32>
    %cst_67 = arith.constant 0.000000e+00 : f32
    %81 = vector.broadcast %cst_67 : f32 to vector<4x256xf32>
    %82 = arith.select %20, %80, %81 : vector<4x256xi1>, vector<4x256xf32>
    %c12_68 = arith.constant 12 : index
    %c0_69 = arith.constant 0 : index
    %83 = vector.load %arg8[%c12_68, %c0_69] : memref<36x256xf32, #tpu.memory_space<vmem>>, vector<4x256xf32>
    tpu.vector_store %arg8[%c12_68, %c0_69], %82 {strides = array<i32>} : memref<36x256xf32, #tpu.memory_space<vmem>>, vector<4x256xf32>,
    %c0_70 = arith.constant 0 : index
    %c128_71 = arith.constant 128 : index
    %84 = vector.load %arg7[%c0_70, %c128_71] : memref<4x512xf32, #tpu.memory_space<vmem>>, vector<4x256xf32>
    %c16_72 = arith.constant 16 : index
    %c0_73 = arith.constant 0 : index
    %85 = vector.load %arg8[%c16_72, %c0_73] : memref<36x256xf32, #tpu.memory_space<vmem>>, vector<4x256xf32>
    tpu.vector_store %arg8[%c16_72, %c0_73], %84 {strides = array<i32>} : memref<36x256xf32, #tpu.memory_space<vmem>>, vector<4x256xf32>,
    %c0_74 = arith.constant 0 : index
    %c129_75 = arith.constant 129 : index
    %86 = vector.load %arg7[%c0_74, %c129_75] : memref<4x512xf32, #tpu.memory_space<vmem>>, vector<4x256xf32>
    %cst_76 = arith.constant 0.000000e+00 : f32
    %87 = vector.broadcast %cst_76 : f32 to vector<4x256xf32>
    %88 = arith.select %22, %86, %87 : vector<4x256xi1>, vector<4x256xf32>
    %c20_77 = arith.constant 20 : index
    %c0_78 = arith.constant 0 : index
    %89 = vector.load %arg8[%c20_77, %c0_78] : memref<36x256xf32, #tpu.memory_space<vmem>>, vector<4x256xf32>
    tpu.vector_store %arg8[%c20_77, %c0_78], %88 {strides = array<i32>} : memref<36x256xf32, #tpu.memory_space<vmem>>, vector<4x256xf32>,
    %c0_79 = arith.constant 0 : index
    %c143_80 = arith.constant 143 : index
    %90 = vector.load %arg7[%c0_79, %c143_80] : memref<4x512xf32, #tpu.memory_space<vmem>>, vector<4x256xf32>
    %cst_81 = arith.constant 0.000000e+00 : f32
    %91 = vector.broadcast %cst_81 : f32 to vector<4x256xf32>
    %92 = arith.select %20, %90, %91 : vector<4x256xi1>, vector<4x256xf32>
    %c24_82 = arith.constant 24 : index
    %c0_83 = arith.constant 0 : index
    %93 = vector.load %arg8[%c24_82, %c0_83] : memref<36x256xf32, #tpu.memory_space<vmem>>, vector<4x256xf32>
    tpu.vector_store %arg8[%c24_82, %c0_83], %92 {strides = array<i32>} : memref<36x256xf32, #tpu.memory_space<vmem>>, vector<4x256xf32>,
    %c0_84 = arith.constant 0 : index
    %c144_85 = arith.constant 144 : index
    %94 = vector.load %arg7[%c0_84, %c144_85] : memref<4x512xf32, #tpu.memory_space<vmem>>, vector<4x256xf32>
    %c28_86 = arith.constant 28 : index
    %c0_87 = arith.constant 0 : index
    %95 = vector.load %arg8[%c28_86, %c0_87] : memref<36x256xf32, #tpu.memory_space<vmem>>, vector<4x256xf32>
    tpu.vector_store %arg8[%c28_86, %c0_87], %94 {strides = array<i32>} : memref<36x256xf32, #tpu.memory_space<vmem>>, vector<4x256xf32>,
    %c0_88 = arith.constant 0 : index
    %c145_89 = arith.constant 145 : index
    %96 = vector.load %arg7[%c0_88, %c145_89] : memref<4x512xf32, #tpu.memory_space<vmem>>, vector<4x256xf32>
    %cst_90 = arith.constant 0.000000e+00 : f32
    %97 = vector.broadcast %cst_90 : f32 to vector<4x256xf32>
    %98 = arith.select %22, %96, %97 : vector<4x256xi1>, vector<4x256xf32>
    %c32_91 = arith.constant 32 : index
    %c0_92 = arith.constant 0 : index
    %99 = vector.load %arg8[%c32_91, %c0_92] : memref<36x256xf32, #tpu.memory_space<vmem>>, vector<4x256xf32>
    tpu.vector_store %arg8[%c32_91, %c0_92], %98 {strides = array<i32>} : memref<36x256xf32, #tpu.memory_space<vmem>>, vector<4x256xf32>,
    %c0_93 = arith.constant 0 : index
    %c0_94 = arith.constant 0 : index
    %100 = vector.load %arg8[%c0_93, %c0_94] : memref<36x256xf32, #tpu.memory_space<vmem>>, vector<36x256xf32>
    %101 = arith.truncf %100 : vector<36x256xf32> to vector<36x256xbf16>
    %cst_95 = arith.constant dense<0.000000e+00> : vector<4x256xf32>
    %102 = tpu.matmul %28, %101, %cst_95 {dimension_numbers = #tpu.dot_dimension_numbers<[1], [0], [0], [1], [0, 0, 1, 1], [], []>} : vector<4x36xbf16>, vector<36x256xbf16>, vector<4x256xf32> -> vector<4x256xf32>
    %103 = vector.broadcast %30 : vector<4x1xf32> to vector<4x256xf32>
    %104 = arith.addf %102, %103 : vector<4x256xf32>
    %105 = arith.addf %1, %104 : vector<4x256xf32>
    %cst_96 = arith.constant 0.000000e+00 : f32
    %106 = vector.broadcast %cst_96 : f32 to vector<4x256xf32>
    %107 = arith.maximumf %105, %106 : vector<4x256xf32>
    %c0_97 = arith.constant 0 : index
    %c0_98 = arith.constant 0 : index
    %c0_99 = arith.constant 0 : index
    %108 = vector.load %arg6[%c0_97, %c0_98, %c0_99] : memref<1x4x256xf32, #tpu.memory_space<vmem>>, vector<1x4x256xf32>
    %109 = vector.shape_cast %108 : vector<1x4x256xf32> to vector<4x256xf32>
    %110 = vector.shape_cast %107 : vector<4x256xf32> to vector<1x4x256xf32>
    tpu.vector_store %arg6[%c0_97, %c0_98, %c0_99], %110 {strides = array<i32>} : memref<1x4x256xf32, #tpu.memory_space<vmem>>, vector<1x4x256xf32>,
    return
  }
  func.func @transform_0(%arg0: i32) -> (i32, i32, i32) {
    %c0_i32 = arith.constant 0 : i32
    %c0_i32_0 = arith.constant 0 : i32
    %c0_i32_1 = arith.constant 0 : i32
    return %arg0, %c0_i32, %c0_i32_0 : i32, i32, i32
  }
  func.func @transform_1(%arg0: i32) -> (i32, i32) {
    %c0_i32 = arith.constant 0 : i32
    %c0_i32_0 = arith.constant 0 : i32
    %c0_i32_1 = arith.constant 0 : i32
    return %c0_i32, %c0_i32_0 : i32, i32
  }
  func.func @transform_2(%arg0: i32) -> (i32, i32) {
    %c0_i32 = arith.constant 0 : i32
    %c0_i32_0 = arith.constant 0 : i32
    %c0_i32_1 = arith.constant 0 : i32
    return %c0_i32, %c0_i32_0 : i32, i32
  }
  func.func @transform_3(%arg0: i32) -> (i32, i32) {
    %c0_i32 = arith.constant 0 : i32
    %c0_i32_0 = arith.constant 0 : i32
    %c0_i32_1 = arith.constant 0 : i32
    return %c0_i32, %c0_i32_0 : i32, i32
  }
  func.func @transform_4(%arg0: i32) -> (i32, i32) {
    %c0_i32 = arith.constant 0 : i32
    %c0_i32_0 = arith.constant 0 : i32
    %c0_i32_1 = arith.constant 0 : i32
    return %c0_i32, %c0_i32_0 : i32, i32
  }
  func.func @transform_5(%arg0: i32) -> (i32, i32, i32) {
    %c0_i32 = arith.constant 0 : i32
    %c0_i32_0 = arith.constant 0 : i32
    %c0_i32_1 = arith.constant 0 : i32
    return %arg0, %c0_i32, %c0_i32_0 : i32, i32, i32
  }
}

</mosaic_0001>

<llo_original>
// kernel: squeeze.1
$region0: #{squeeze.1}
  %s0 = inlined_call_operand.vmem [shape: f32[1,4,256], index: 0, kind: input, shape index: {}]
  %s1 = inlined_call_operand.hbm [shape: f32[4,16,16], index: 1, kind: output, shape index: {}]
  $region1: #{squeeze.1} parent=0
    #allocation0 [shape = 'u8[32768]{0}', space=vmem, size = 0x8000, scoped, tag = 'operand span for operand 1']
    #allocation1 [shape = 's32[1]{0}', space=sflag, size = 0x4, scoped, tag = 'scoped memory for squeeze.1']
    #allocation2 [shape = 'u8[8192]{0}', space=vmem, size = 0x2000, scoped, tag = 'scoped mem for input reshape']
    %2 = vsyncpa [#allocation1], 0
    %s4 = sshllo.u32 0, 4
    %s5 = scalar_lea.vmem %s0, 4
    %v6 = vld [vmem:[%s5] sm:%s4]
    %s7 = scalar_lea.vmem [#allocation2], 8
    %8 = vst [vmem:[%s7] sm:%s4] %v6
    %v9 = vld [vmem:[%s0] sm:%s4]
    %10 = vst [vmem:[#allocation2] sm:%s4] %v9
    %v11 = vld [vmem:[#allocation2] sm:$0xf]
    %vm12 = vcmask 130048
    %13 = vst.msk [vmem:[#allocation0] ss:$16 sm:$0x3] %vm12, %v11
    %14 = vst.msk [vmem:[#allocation0] ss:$16 sm:$0xc] %vm12, %v11
    %s15 = scalar_lea.vmem [#allocation2], 8
    %v16 = vld [vmem:[%s15] sm:$0xf]
    %vm17 = vcmask 130048
    %s18 = scalar_lea.vmem [#allocation0], 8
    %19 = vst.msk [vmem:[%s18] ss:$16 sm:$0x3] %vm17, %v16
    %s20 = scalar_lea.vmem [#allocation0], 8
    %21 = vst.msk [vmem:[%s20] ss:$16 sm:$0xc] %vm17, %v16
    %v22 = vld.sshfl [vmem:[#allocation2] sm:$0xff pattern:$0xb3a29180]
    %23 = vrot.lane.b32.xlu0 %v22, 112
    %v24 = vpop.permute.xlu0 %23
    %vm25 = vcmask 130048
    %s26 = scalar_lea.vmem [#allocation0], 1
    %27 = vst.msk [vmem:[%s26] ss:$8 sm:$0xf] %vm25, %v24
    %s28 = scalar_lea.vmem [#allocation0], 1
    %29 = vst.msk [vmem:[%s28] ss:$8 sm:$0xf0] %vm25, %v24
    %v30 = vld.sshfl [vmem:[#allocation2] sm:$0xff pattern:$0xb3a29180]
    %31 = vrot.lane.b32.xlu0 %v30, 96
    %v32 = vpop.permute.xlu0 %31
    %vm33 = vcmask 130048
    %s34 = scalar_lea.vmem [#allocation0], 2
    %35 = vst.msk [vmem:[%s34] ss:$8 sm:$0xf] %vm33, %v32
    %s36 = scalar_lea.vmem [#allocation0], 2
    %37 = vst.msk [vmem:[%s36] ss:$8 sm:$0xf0] %vm33, %v32
    %v38 = vld.sshfl [vmem:[#allocation2] sm:$0xff pattern:$0xb3a29180]
    %39 = vrot.lane.b32.xlu0 %v38, 80
    %v40 = vpop.permute.xlu0 %39
    %vm41 = vcmask 130048
    %s42 = scalar_lea.vmem [#allocation0], 3
    %43 = vst.msk [vmem:[%s42] ss:$8 sm:$0xf] %vm41, %v40
    %s44 = scalar_lea.vmem [#allocation0], 3
    %45 = vst.msk [vmem:[%s44] ss:$8 sm:$0xf0] %vm41, %v40
    %v46 = vld.sshfl [vmem:[#allocation2] sm:$0xff pattern:$0xb3a29180]
    %47 = vrot.lane.b32.xlu0 %v46, 64
    %v48 = vpop.permute.xlu0 %47
    %vm49 = vcmask 130048
    %s50 = scalar_lea.vmem [#allocation0], 4
    %51 = vst.msk [vmem:[%s50] ss:$8 sm:$0xf] %vm49, %v48
    %s52 = scalar_lea.vmem [#allocation0], 4
    %53 = vst.msk [vmem:[%s52] ss:$8 sm:$0xf0] %vm49, %v48
    %v54 = vld.sshfl [vmem:[#allocation2] sm:$0xff pattern:$0xb3a29180]
    %55 = vrot.lane.b32.xlu0 %v54, 48
    %v56 = vpop.permute.xlu0 %55
    %vm57 = vcmask 130048
    %s58 = scalar_lea.vmem [#allocation0], 5
    %59 = vst.msk [vmem:[%s58] ss:$8 sm:$0xf] %vm57, %v56
    %s60 = scalar_lea.vmem [#allocation0], 5
    %61 = vst.msk [vmem:[%s60] ss:$8 sm:$0xf0] %vm57, %v56
    %v62 = vld.sshfl [vmem:[#allocation2] sm:$0xff pattern:$0xb3a29180]
    %63 = vrot.lane.b32.xlu0 %v62, 32
    %v64 = vpop.permute.xlu0 %63
    %vm65 = vcmask 130048
    %s66 = scalar_lea.vmem [#allocation0], 6
    %67 = vst.msk [vmem:[%s66] ss:$8 sm:$0xf] %vm65, %v64
    %s68 = scalar_lea.vmem [#allocation0], 6
    %69 = vst.msk [vmem:[%s68] ss:$8 sm:$0xf0] %vm65, %v64
    %v70 = vld.sshfl [vmem:[#allocation2] sm:$0xff pattern:$0xb3a29180]
    %71 = vrot.lane.b32.xlu0 %v70, 16
    %v72 = vpop.permute.xlu0 %71
    %vm73 = vcmask 130048
    %s74 = scalar_lea.vmem [#allocation0], 7
    %75 = vst.msk [vmem:[%s74] ss:$8 sm:$0xf] %vm73, %v72
    %s76 = scalar_lea.vmem [#allocation0], 7
    %77 = vst.msk [vmem:[%s76] ss:$8 sm:$0xf0] %vm73, %v72
    %s79 = ssub.s32 1024, 1024
    %80 = vsyncadd [#allocation1], %s79
    %s82 = sshll.u32 [#allocation0], 4
    %s83 = int_to_ptr.vmem [resolvable:$true] %s82
    %85 = dma.vmem_to_hbm [thread:$0]  %s83, 1024, %s1, [#allocation1]
    %86 = dma.done [#allocation1], 1024
    %87 = vsyncpa [#allocation1], 1

// kernel: unary_module_forward.1
$region0: #{unary_module_forward.1}
  #allocation0 [shape = 'u32[]', space=smem, size = 0x4, offset = 0x4, fixed_abs, tag = 'smem constant byte address 0x4 - core index']
  #allocation1 [shape = 'u32[144,128]{1,0:T(1,128)}', space=vmem, size = 0x12000, scoped, tag = 'internal scratch']
  #allocation2 [shape = 'f32[4,512]{1,0:T(4,128)}', space=vmem, size = 0x2000, scoped, tag = 'scratch operand']
  #allocation3 [shape = 'f32[36,256]{1,0:T(8,128)}', space=vmem, size = 0xa000, scoped, tag = 'scratch operand']
  %s0 = inlined_call_operand.vmem [shape: f32[2,4,256], index: 0, kind: input, shape index: {}]
  %s1 = inlined_call_operand.vmem [shape: bf16[4,36], index: 1, kind: input, shape index: {}]
  %s2 = inlined_call_operand.vmem [shape: f32[4,1], index: 2, kind: input, shape index: {}]
  %s3 = inlined_call_operand.vmem [shape: bf16[4,36], index: 3, kind: input, shape index: {}]
  %s4 = inlined_call_operand.vmem [shape: f32[4,1], index: 4, kind: input, shape index: {}]
  %s5 = inlined_call_operand.vmem [shape: f32[2,4,256], index: 5, kind: output, shape index: {}]
  %s6 = sld [smem:[#allocation0]]
  $region53: #{unary_module_forward.1} parent=0
    _
  %s8 = ssub.s32 1, %s6
  %s9 = scalar_select 0, %s8, %s6
  loop: start=0, step=1, limit=4
  $region2: #{unary_module_forward.1} parent=0 // loop_pre_header
    _
  $region3: #{unary_module_forward.1} parent=0 // loop_header
    %s11 = sphi 0, %s15
    %p12 = scmp.ge.s32.totalorder %s11, 4
    %s21 = sphi 0, %s23
    %s24 = sphi 0, %s21
    %s25 = sphi 0, %s24
    %s41 = sphi 0, %s25
    %s45 = sphi 0, %s45
    %s47 = sphi 0, %s45
    %s48 = sphi 0, %s47
    %s62 = sphi 0, %s48
    %s66 = sphi 0, %s66
    %s68 = sphi 0, %s66
    %s69 = sphi 0, %s68
    %s83 = sphi 0, %s69
    %s87 = sphi 0, %s87
    %s89 = sphi 0, %s87
    %s90 = sphi 0, %s89
    %s104 = sphi 0, %s90
    %s108 = sphi 0, %s108
    %s110 = sphi 0, %s108
    %s111 = sphi 0, %s110
    %s125 = sphi 0, %s111
    %s131 = sphi 0, %s133
    %s134 = sphi 0, %s131
    %s135 = sphi 0, %s134
    %s151 = sphi 0, %s135
  $region4: #{unary_module_forward.1} parent=0 // loop_header_branch
    %14 = sbr.rel (%p12) target = $region8
  $region5: #{unary_module_forward.1} parent=0 // loop_body
    %s16 = ssub.s32 %s11, 1
    %s17 = ssub.s32 %s11, 2
    %s18 = sadd.s32 %s11, 1
    %s19 = ssub.s32 %s11, %s18
    %p20 = scmp.eq.s32.totalorder %s19, 0
    %s22 = sadd.s32 %s21, 1
    %s23 = scalar_select %p20, %s21, %s22
    %p26 = pneg %p20
    %p27 = scmp.eq.s32.totalorder %s11, 1
    %p28 = por %p26, %p27
    %p29 = scmp.ne.s32.totalorder %s21, %s24
    %p30 = scmp.eq.s32.totalorder %s11, 0
    %p31 = por %p29, %p30
    %p32 = scmp.ne.s32.totalorder %s21, %s24
    %p33 = scmp.eq.s32.totalorder %s16, 1
    %p34 = por %p32, %p33
    %p35 = scmp.ne.s32.totalorder %s24, %s25
    %p36 = scmp.eq.s32.totalorder %s16, 0
    %p37 = por %p35, %p36
    %p38 = scmp.ne.s32.totalorder %s24, %s25
    %p39 = scmp.eq.s32.totalorder %s17, 1
    %p40 = por %p38, %p39
    %p42 = scmp.ne.s32.totalorder %s25, %s41
    %p43 = scmp.eq.s32.totalorder %s17, 0
    %p44 = por %p42, %p43
    %s46 = sadd.s32 %s45, 1
    %p49 = scmp.eq.s32.totalorder %s11, 1
    %p50 = scmp.ne.s32.totalorder %s45, %s47
    %p51 = scmp.eq.s32.totalorder %s11, 0
    %p52 = por %p50, %p51
    %p53 = scmp.ne.s32.totalorder %s45, %s47
    %p54 = scmp.eq.s32.totalorder %s16, 1
    %p55 = por %p53, %p54
    %p56 = scmp.ne.s32.totalorder %s47, %s48
    %p57 = scmp.eq.s32.totalorder %s16, 0
    %p58 = por %p56, %p57
    %p59 = scmp.ne.s32.totalorder %s47, %s48
    %p60 = scmp.eq.s32.totalorder %s17, 1
    %p61 = por %p59, %p60
    %p63 = scmp.ne.s32.totalorder %s48, %s62
    %p64 = scmp.eq.s32.totalorder %s17, 0
    %p65 = por %p63, %p64
    %s67 = sadd.s32 %s66, 1
    %p70 = scmp.eq.s32.totalorder %s11, 1
    %p71 = scmp.ne.s32.totalorder %s66, %s68
    %p72 = scmp.eq.s32.totalorder %s11, 0
    %p73 = por %p71, %p72
    %p74 = scmp.ne.s32.totalorder %s66, %s68
    %p75 = scmp.eq.s32.totalorder %s16, 1
    %p76 = por %p74, %p75
    %p77 = scmp.ne.s32.totalorder %s68, %s69
    %p78 = scmp.eq.s32.totalorder %s16, 0
    %p79 = por %p77, %p78
    %p80 = scmp.ne.s32.totalorder %s68, %s69
    %p81 = scmp.eq.s32.totalorder %s17, 1
    %p82 = por %p80, %p81
    %p84 = scmp.ne.s32.totalorder %s69, %s83
    %p85 = scmp.eq.s32.totalorder %s17, 0
    %p86 = por %p84, %p85
    %s88 = sadd.s32 %s87, 1
    %p91 = scmp.eq.s32.totalorder %s11, 1
    %p92 = scmp.ne.s32.totalorder %s87, %s89
    %p93 = scmp.eq.s32.totalorder %s11, 0
    %p94 = por %p92, %p93
    %p95 = scmp.ne.s32.totalorder %s87, %s89
    %p96 = scmp.eq.s32.totalorder %s16, 1
    %p97 = por %p95, %p96
    %p98 = scmp.ne.s32.totalorder %s89, %s90
    %p99 = scmp.eq.s32.totalorder %s16, 0
    %p100 = por %p98, %p99
    %p101 = scmp.ne.s32.totalorder %s89, %s90
    %p102 = scmp.eq.s32.totalorder %s17, 1
    %p103 = por %p101, %p102
    %p105 = scmp.ne.s32.totalorder %s90, %s104
    %p106 = scmp.eq.s32.totalorder %s17, 0
    %p107 = por %p105, %p106
    %s109 = sadd.s32 %s108, 1
    %p112 = scmp.eq.s32.totalorder %s11, 1
    %p113 = scmp.ne.s32.totalorder %s108, %s110
    %p114 = scmp.eq.s32.totalorder %s11, 0
    %p115 = por %p113, %p114
    %p116 = scmp.ne.s32.totalorder %s108, %s110
    %p117 = scmp.eq.s32.totalorder %s16, 1
    %p118 = por %p116, %p117
    %p119 = scmp.ne.s32.totalorder %s110, %s111
    %p120 = scmp.eq.s32.totalorder %s16, 0
    %p121 = por %p119, %p120
    %p122 = scmp.ne.s32.totalorder %s110, %s111
    %p123 = scmp.eq.s32.totalorder %s17, 1
    %p124 = por %p122, %p123
    %p126 = scmp.ne.s32.totalorder %s111, %s125
    %p127 = scmp.eq.s32.totalorder %s17, 0
    %p128 = por %p126, %p127
    %s129 = ssub.s32 %s11, %s18
    %p130 = scmp.eq.s32.totalorder %s129, 0
    %s132 = sadd.s32 %s131, 1
    %s133 = scalar_select %p130, %s131, %s132
    %p136 = pneg %p130
    %p137 = scmp.eq.s32.totalorder %s11, 1
    %p138 = por %p136, %p137
    %p139 = scmp.ne.s32.totalorder %s131, %s134
    %p140 = scmp.eq.s32.totalorder %s11, 0
    %p141 = por %p139, %p140
    %p142 = scmp.ne.s32.totalorder %s131, %s134
    %p143 = scmp.eq.s32.totalorder %s16, 1
    %p144 = por %p142, %p143
    %p145 = scmp.ne.s32.totalorder %s134, %s135
    %p146 = scmp.eq.s32.totalorder %s16, 0
    %p147 = por %p145, %p146
    %p148 = scmp.ne.s32.totalorder %s134, %s135
    %p149 = scmp.eq.s32.totalorder %s17, 1
    %p150 = por %p148, %p149
    %p152 = scmp.ne.s32.totalorder %s135, %s151
    %p153 = scmp.eq.s32.totalorder %s17, 0
    %p154 = por %p152, %p153
    %p155 = scmp.le.s32.totalorder 1, %s11
    %p156 = scmp.lt.s32.totalorder %s11, 3
    %p157 = pnand %p155, %p156
    %p158 = pneg %p157
    // Predicated region
    $region9: #{unary_module_forward.1} parent=5 // pred_check
      _
    $region10: #{unary_module_forward.1} parent=5 // pred_check_branch
      %160 = sbr.rel (%p157) target = $region12
    $region11: #{unary_module_forward.1} parent=5 // pred_region
      %s161 = ssub.s32 %s11, 1
      // Predicated region
      $region13: #{unary_module_forward.1} parent=11 // pred_check
        %p162 = pneg %p58
      $region14: #{unary_module_forward.1} parent=11 // pred_check_branch
        %164 = sbr.rel (%p162) target = $region16
      $region15: #{unary_module_forward.1} parent=11 // pred_region
        _
      $region16: #{unary_module_forward.1} parent=11 // pred_fallthru
        _
      // Predicated region
      $region17: #{unary_module_forward.1} parent=11 // pred_check
        %p165 = pneg %p79
      $region18: #{unary_module_forward.1} parent=11 // pred_check_branch
        %167 = sbr.rel (%p165) target = $region20
      $region19: #{unary_module_forward.1} parent=11 // pred_region
        _
      $region20: #{unary_module_forward.1} parent=11 // pred_fallthru
        _
      // Predicated region
      $region21: #{unary_module_forward.1} parent=11 // pred_check
        %p168 = pneg %p100
      $region22: #{unary_module_forward.1} parent=11 // pred_check_branch
        %170 = sbr.rel (%p168) target = $region24
      $region23: #{unary_module_forward.1} parent=11 // pred_region
        _
      $region24: #{unary_module_forward.1} parent=11 // pred_fallthru
        _
      // Predicated region
      $region25: #{unary_module_forward.1} parent=11 // pred_check
        %p171 = pneg %p121
      $region26: #{unary_module_forward.1} parent=11 // pred_check_branch
        %173 = sbr.rel (%p171) target = $region28
      $region27: #{unary_module_forward.1} parent=11 // pred_region
        _
      $region28: #{unary_module_forward.1} parent=11 // pred_fallthru
        _
    $region12: #{unary_module_forward.1} parent=5 // pred_fallthru
      _
    %p174 = scmp.lt.s32.totalorder %s11, 2
    // Predicated region
    $region29: #{unary_module_forward.1} parent=5 // pred_check
      %p175 = pneg %p174
    $region30: #{unary_module_forward.1} parent=5 // pred_check_branch
      %177 = sbr.rel (%p175) target = $region32
    $region31: #{unary_module_forward.1} parent=5 // pred_region
      // Predicated region
      $region33: #{unary_module_forward.1} parent=31 // pred_check
        %p178 = pneg %p31
      $region34: #{unary_module_forward.1} parent=31 // pred_check_branch
        %180 = sbr.rel (%p178) target = $region36
      $region35: #{unary_module_forward.1} parent=31 // pred_region
        %p181 = scmp.lt.s32.totalorder %s11, 1
        %s182 = scalar_select %p181, %s11, 1
        %s183 = smul.addr %s182, 2
        %s184 = smul.addr %s183, 4
        %s185 = scalar_lea.vmem %s0, %s184
      $region36: #{unary_module_forward.1} parent=31 // pred_fallthru
        _
    $region32: #{unary_module_forward.1} parent=5 // pred_fallthru
      _
    %p186 = scmp.le.s32.totalorder 1, %s11
    %p187 = scmp.lt.s32.totalorder %s11, 3
    %p188 = pnand %p186, %p187
    %p189 = pneg %p188
    // Predicated region
    $region37: #{unary_module_forward.1} parent=5 // pred_check
      _
    $region38: #{unary_module_forward.1} parent=5 // pred_check_branch
      %191 = sbr.rel (%p188) target = $region40
    $region39: #{unary_module_forward.1} parent=5 // pred_region
      %s192 = ssub.s32 %s11, 1
      %p193 = scmp.lt.s32.totalorder %s16, 1
      %s194 = scalar_select %p193, %s16, 1
      %s195 = smul.addr %s194, 2
      %s196 = smul.addr %s195, 4
      %s197 = scalar_lea.vmem %s0, %s196
      %p198 = pneg %p37
      %p199 = pneg %p34
      %p200 = pneg %p58
      %p201 = pneg %p55
      %p202 = pneg %p79
      %p203 = pneg %p76
      %p204 = pneg %p100
      %p205 = pneg %p97
      %p206 = pneg %p121
      %p207 = pneg %p118
      %p208 = pneg %p147
      %p209 = pneg %p144
      %p210 = scmp.lt.s32.totalorder %s16, 1
      %s211 = scalar_select %p210, %s16, 1
      %s212 = smul.addr %s211, 2
      %s213 = smul.addr %s212, 4
      %s214 = scalar_lea.vmem %s5, %s213
      %p215 = scmp.lt.s32.totalorder %s16, 1
      %s216 = scalar_select %p215, %s16, 1
      %s217 = smul.addr %s216, 2
      %s218 = smul.addr %s217, 4
      %s219 = scalar_lea.vmem %s0, %s218
      %p220 = scmp.lt.s32.totalorder %s16, 1
      %s221 = scalar_select %p220, %s16, 1
      %s222 = smul.addr %s221, 2
      %s223 = smul.addr %s222, 4
      %s224 = scalar_lea.vmem %s5, %s223
      %v226 = vld [vmem:[%s219] sm:$0xff]
      %v227 = vlaneseq
      %v228 = vand.u32 %v227, 127
      %v229 = vadd.s32 %v228, 128
      %vm230 = vcmp.lt.s32.totalorder %v228, 0
      %v231 = vsub.s32 0, %v228
      %v232 = vsel %vm230, %v231, %v228
      %v233 = vshrl.u32 %v232, 4
      %v234 = vand.u32 %v232, 15
      %v235 = vsub.s32 0, %v234
      %v236 = vsel %vm230, %v235, %v234
      %vm237 = vcmp.lt.s32.totalorder %v229, 0
      %v238 = vsub.s32 0, %v229
      %v239 = vsel %vm237, %v238, %v229
      %v240 = vshrl.u32 %v239, 4
      %v241 = vand.u32 %v239, 15
      %v242 = vsub.s32 0, %v241
      %v243 = vsel %vm237, %v242, %v241
      %vm244 = vcmp.ne.s32.totalorder %v236, 0
      %vm245 = vcmp.ne.s32.totalorder %v243, 0
      %vm246 = vcmp.lt.s32.totalorder %v236, 0
      %vm247 = vcmp.lt.s32.totalorder %v243, 0
      %vm248 = vmand %vm246, %vm244
      %vm249 = vmand %vm247, %vm245
      %v250 = vadd.s32 %v236, 16
      %v251 = vadd.s32 %v243, 16
      %v252 = vsel %vm248, %v250, %v236
      %v253 = vsel %vm249, %v251, %v243
      %vm254 = vcmp.ge.s32.totalorder %v252, 1
      %vm255 = vcmp.ge.s32.totalorder %v253, 1
      %vm256 = vcmp.le.s32.totalorder %v252, 14
      %vm257 = vcmp.le.s32.totalorder %v253, 14
      %258 = vst [vmem:[#allocation2] sm:$0xf] 0.0
      %259 = vst [vmem:[#allocation2 + $0xc] sm:$0xf] 0.0
      %v260 = vld [vmem:[%s1] sm:$0x3]
      %v261 = vld [vmem:[%s3] sm:$0x3]
      %v262 = vld [vmem:[%s2] sm:$0xf]
      %v263 = vld [vmem:[%s4] sm:$0xf]
      %264 = vst [vmem:[#allocation2 + $0x4] sm:$0xff] %v226
      %v265 = vld [vmem:[#allocation2] sm:$0xff]
      %v266 = vld [vmem:[#allocation2 + $0x8] sm:$0xf]
      %v269 = vcombine.high %v265, %v265
      %270 = vrot.lane.b32.xlu0 %v265, 17
      %v271 = vpop.permute.xlu0 %270
      %272 = vrot.lane.b32.xlu0 %v269, 17
      %v273 = vpop.permute.xlu0 %272
      %274 = vrot.lane.b32.xlu0 %v266, 17
      %v275 = vpop.permute.xlu0 %274
      %vm276 = vcmask 138240
      %v277 = vsel %vm276, %v271, %v273
      %v278 = vsel %vm276, %v273, %v275
      %v281 = vsel %vm254, %v277, 0.0
      %v282 = vsel %vm255, %v278, 0.0
      %283 = vst [vmem:[#allocation3] sm:$0xf] %v281
      %284 = vst [vmem:[#allocation3 + $0x8] sm:$0xf] %v282
      %v285 = vld [vmem:[#allocation2] sm:$0xff]
      %v286 = vld [vmem:[#allocation2 + $0x8] sm:$0xf]
      %v289 = vcombine.low %v285, %v285
      %v290 = vcombine.low %v286, %v286
      %291 = vrot.lane.b32.xlu0 %v289, 16
      %v292 = vpop.permute.xlu0 %291
      %293 = vrot.lane.b32.xlu0 %v285, 16
      %v294 = vpop.permute.xlu0 %293
      %295 = vrot.lane.b32.xlu0 %v290, 16
      %v296 = vpop.permute.xlu0 %295
      %vm297 = vcmask 130048
      %v298 = vsel %vm297, %v292, %v294
      %v299 = vsel %vm297, %v294, %v296
      %302 = vst [vmem:[#allocation3] sm:$0xf0] %v298
      %303 = vst [vmem:[#allocation3 + $0x8] sm:$0xf0] %v299
      %v304 = vld [vmem:[#allocation2] sm:$0xff]
      %v305 = vld [vmem:[#allocation2 + $0x8] sm:$0xf]
      %v308 = vcombine.high %v304, %v304
      %309 = vrot.lane.b32.xlu0 %v304, 15
      %v310 = vpop.permute.xlu0 %309
      %311 = vrot.lane.b32.xlu0 %v308, 15
      %v312 = vpop.permute.xlu0 %311
      %313 = vrot.lane.b32.xlu0 %v305, 15
      %v314 = vpop.permute.xlu0 %313
      %vm315 = vcmask 121856
      %v316 = vsel %vm315, %v310, %v312
      %v317 = vsel %vm315, %v312, %v314
      %v320 = vsel %vm256, %v316, 0.0
      %v321 = vsel %vm257, %v317, 0.0
      %322 = vst [vmem:[#allocation3 + $0x10] sm:$0xf] %v320
      %323 = vst [vmem:[#allocation3 + $0x18] sm:$0xf] %v321
      %v324 = vld [vmem:[#allocation2] sm:$0xff]
      %v325 = vld [vmem:[#allocation2 + $0x8] sm:$0xf]
      %v328 = vcombine.high %v324, %v324
      %329 = vrot.lane.b32.xlu0 %v324, 1
      %v330 = vpop.permute.xlu0 %329
      %331 = vrot.lane.b32.xlu0 %v328, 1
      %v332 = vpop.permute.xlu0 %331
      %333 = vrot.lane.b32.xlu0 %v325, 1
      %v334 = vpop.permute.xlu0 %333
      %vm335 = vcmask 7168
      %v336 = vsel %vm335, %v330, %v332
      %v337 = vsel %vm335, %v332, %v334
      %v340 = vsel %vm254, %v336, 0.0
      %v341 = vsel %vm255, %v337, 0.0
      %v344 = vrot.slane %v340, 4
      %v345 = vrot.slane %v341, 4
      %348 = vst [vmem:[#allocation3 + $0x10] sm:$0xf0] %v344
      %349 = vst [vmem:[#allocation3 + $0x18] sm:$0xf0] %v345
      %v350 = vld [vmem:[#allocation2 + $0x4] sm:$0xff]
      %v352 = vcombine.high %v350, %v350
      %354 = vst [vmem:[#allocation3 + $0x20] sm:$0xf] %v350
      %355 = vst [vmem:[#allocation3 + $0x28] sm:$0xf] %v352
      %v356 = vld [vmem:[#allocation2 + $0x4] sm:$0xff]
      %v357 = vld [vmem:[#allocation2 + $0xc] sm:$0xf]
      %v360 = vcombine.high %v356, %v356
      %361 = vrot.lane.b32.xlu0 %v356, 127
      %v362 = vpop.permute.xlu0 %361
      %363 = vrot.lane.b32.xlu0 %v360, 127
      %v364 = vpop.permute.xlu0 %363
      %365 = vrot.lane.b32.xlu0 %v357, 127
      %v366 = vpop.permute.xlu0 %365
      %vm367 = vcmask 1039360
      %v368 = vsel %vm367, %v362, %v364
      %v369 = vsel %vm367, %v364, %v366
      %v372 = vsel %vm256, %v368, 0.0
      %v373 = vsel %vm257, %v369, 0.0
      %v376 = vrot.slane %v372, 4
      %v377 = vrot.slane %v373, 4
      %380 = vst [vmem:[#allocation3 + $0x20] sm:$0xf0] %v376
      %381 = vst [vmem:[#allocation3 + $0x28] sm:$0xf0] %v377
      %v382 = vld [vmem:[#allocation2 + $0x4] sm:$0xff]
      %v383 = vld [vmem:[#allocation2 + $0xc] sm:$0xf]
      %v386 = vcombine.high %v382, %v382
      %387 = vrot.lane.b32.xlu0 %v382, 113
      %v388 = vpop.permute.xlu0 %387
      %389 = vrot.lane.b32.xlu0 %v386, 113
      %v390 = vpop.permute.xlu0 %389
      %391 = vrot.lane.b32.xlu0 %v383, 113
      %v392 = vpop.permute.xlu0 %391
      %vm393 = vcmask 924672
      %v394 = vsel %vm393, %v388, %v390
      %v395 = vsel %vm393, %v390, %v392
      %v398 = vsel %vm254, %v394, 0.0
      %v399 = vsel %vm255, %v395, 0.0
      %400 = vst [vmem:[#allocation3 + $0x30] sm:$0xf] %v398
      %401 = vst [vmem:[#allocation3 + $0x38] sm:$0xf] %v399
      %v402 = vld [vmem:[#allocation2 + $0x4] sm:$0xff]
      %v403 = vld [vmem:[#allocation2 + $0xc] sm:$0xf]
      %v406 = vcombine.low %v402, %v402
      %v407 = vcombine.low %v403, %v403
      %408 = vrot.lane.b32.xlu0 %v406, 112
      %v409 = vpop.permute.xlu0 %408
      %410 = vrot.lane.b32.xlu0 %v402, 112
      %v411 = vpop.permute.xlu0 %410
      %412 = vrot.lane.b32.xlu0 %v407, 112
      %v413 = vpop.permute.xlu0 %412
      %vm414 = vcmask 916480
      %v415 = vsel %vm414, %v409, %v411
      %v416 = vsel %vm414, %v411, %v413
      %419 = vst [vmem:[#allocation3 + $0x30] sm:$0xf0] %v415
      %420 = vst [vmem:[#allocation3 + $0x38] sm:$0xf0] %v416
      %v421 = vld [vmem:[#allocation2 + $0x4] sm:$0xff]
      %v422 = vld [vmem:[#allocation2 + $0xc] sm:$0xf]
      %v425 = vcombine.high %v421, %v421
      %426 = vrot.lane.b32.xlu0 %v421, 111
      %v427 = vpop.permute.xlu0 %426
      %428 = vrot.lane.b32.xlu0 %v425, 111
      %v429 = vpop.permute.xlu0 %428
      %430 = vrot.lane.b32.xlu0 %v422, 111
      %v431 = vpop.permute.xlu0 %430
      %vm432 = vcmask 908288
      %v433 = vsel %vm432, %v427, %v429
      %v434 = vsel %vm432, %v429, %v431
      %v437 = vsel %vm256, %v433, 0.0
      %v438 = vsel %vm257, %v434, 0.0
      %439 = vst [vmem:[#allocation3 + $0x40] sm:$0xf] %v437
      %440 = vst [vmem:[#allocation3 + $0x48] sm:$0xf] %v438
      %v441 = vld [vmem:[#allocation3] sm:$0xff]
      %v442 = vld [vmem:[#allocation3 + $0x8] sm:$0xff]
      %v443 = vld [vmem:[#allocation3 + $0x10] sm:$0xff]
      %v444 = vld [vmem:[#allocation3 + $0x18] sm:$0xff]
      %v445 = vld [vmem:[#allocation3 + $0x20] sm:$0xff]
      %v446 = vld [vmem:[#allocation3 + $0x28] sm:$0xff]
      %v447 = vld [vmem:[#allocation3 + $0x30] sm:$0xff]
      %v448 = vld [vmem:[#allocation3 + $0x38] sm:$0xff]
      %v449 = vld [vmem:[#allocation3 + $0x40] sm:$0xf]
      %v450 = vld [vmem:[#allocation3 + $0x48] sm:$0xf]
      %v451 = vpack.c.bf16 %v443, %v441
      %v452 = vpack.c.bf16 %v444, %v442
      %v453 = vpack.c.bf16 %v447, %v445
      %v454 = vpack.c.bf16 %v448, %v446
      %v455 = vpack.c.bf16 %v449, %v449
      %v456 = vpack.c.bf16 %v450, %v450
      %458 = vset.pattern.permute.xlu0 0
      %459 = vperm.xlu0 %458, %v262
      %v460 = vpop.permute.xlu0 %459
      %vm462 = vcmask 293888
      %v464 = vsel %vm462, %v260, 0
      %vm466 = vcmask 1041408
      %v468 = vsel %vm466, %v455, 0
      %v471 = vsel %vm466, %v456, 0
      %473 = vmatprep.subr.bf16.mxu0 %v452
      %474 = vmatpush1.bf16.msra.mxu0 %v451
      %475 = vmatprep.subr.bf16.mxu0 %v454
      %476 = vmatpush1.bf16.msra.mxu0 %v453
      %477 = vmatprep.subr.bf16.mxu0 %v471
      %478 = vmatpush1.bf16.msra.mxu0 %v468
      %479 = vmatprep.subr.bf16.mxu0 0
      %480 = vmatpush1.bf16.msra.mxu0 0
      %481 = vmatprep.subr.bf16.mxu0 0
      %482 = vmatpush1.bf16.msra.mxu0 0
      %483 = vmatprep.subr.bf16.mxu0 0
      %484 = vmatpush1.bf16.msra.mxu0 0
      %485 = vmatprep.subr.bf16.mxu0 0
      %486 = vmatpush1.bf16.msra.mxu0 0
      %487 = vmatprep.subr.bf16.mxu0 0
      %488 = vmatpush1.bf16.msra.mxu0 0
      %489 = vmatprep.subr.bf16.mxu0 0
      %490 = vmatpush1.bf16.msra.mxu0 0
      %491 = vmatprep.subr.bf16.mxu0 0
      %492 = vmatpush1.bf16.msra.mxu0 0
      %493 = vmatprep.subr.bf16.mxu0 0
      %494 = vmatpush1.bf16.msra.mxu0 0
      %495 = vmatprep.subr.bf16.mxu0 0
      %496 = vmatpush1.bf16.msra.mxu0 0
      %497 = vmatprep.subr.bf16.mxu0 0
      %498 = vmatpush1.bf16.msra.mxu0 0
      %499 = vmatprep.subr.bf16.mxu0 0
      %500 = vmatpush1.bf16.msra.mxu0 0
      %501 = vmatprep.subr.bf16.mxu0 0
      %502 = vmatpush1.bf16.msra.mxu0 0
      %503 = vmatprep.subr.bf16.mxu0 0
      %504 = vmatpush1.bf16.msra.mxu0 0
      %505 = vmatprep.mubr.bf16.mxu0 0
      %506 = vmatmul.mubr.bf16.gmra.mrb[0].mxu0 %v464
      %v507 = vpop.f32.mrb[0].mxu0
      %v508 = vadd.f32 %v460, %v507
      %v509 = vpop.f32.mrb[0].mxu0
      %v510 = vadd.f32 %v460, %v509
      %v511 = vpop.f32.mrb[0].mxu0
      %v512 = vpop.f32.mrb[0].mxu0
      %513 = vdwg.mxu0
      %v514 = vmax.f32 %v508, 0.0
      %v515 = vmax.f32 %v510, 0.0
      %v518 = vcombine.low %v514, %v515
      %520 = vst [vmem:[#allocation2 + $0x4] sm:$0xff] %v518
      %v521 = vld [vmem:[#allocation2] sm:$0xff]
      %v522 = vld [vmem:[#allocation2 + $0x8] sm:$0xf]
      %v525 = vcombine.high %v521, %v521
      %526 = vrot.lane.b32.xlu0 %v521, 17
      %v527 = vpop.permute.xlu0 %526
      %528 = vrot.lane.b32.xlu0 %v525, 17
      %v529 = vpop.permute.xlu0 %528
      %530 = vrot.lane.b32.xlu0 %v522, 17
      %v531 = vpop.permute.xlu0 %530
      %v532 = vsel %vm276, %v527, %v529
      %v533 = vsel %vm276, %v529, %v531
      %v536 = vsel %vm254, %v532, 0.0
      %v537 = vsel %vm255, %v533, 0.0
      %538 = vst [vmem:[#allocation3] sm:$0xf] %v536
      %539 = vst [vmem:[#allocation3 + $0x8] sm:$0xf] %v537
      %v540 = vld [vmem:[#allocation2] sm:$0xff]
      %v541 = vld [vmem:[#allocation2 + $0x8] sm:$0xf]
      %v544 = vcombine.low %v540, %v540
      %v545 = vcombine.low %v541, %v541
      %546 = vrot.lane.b32.xlu0 %v544, 16
      %v547 = vpop.permute.xlu0 %546
      %548 = vrot.lane.b32.xlu0 %v540, 16
      %v549 = vpop.permute.xlu0 %548
      %550 = vrot.lane.b32.xlu0 %v545, 16
      %v551 = vpop.permute.xlu0 %550
      %v552 = vsel %vm297, %v547, %v549
      %v553 = vsel %vm297, %v549, %v551
      %556 = vst [vmem:[#allocation3] sm:$0xf0] %v552
      %557 = vst [vmem:[#allocation3 + $0x8] sm:$0xf0] %v553
      %v558 = vld [vmem:[#allocation2] sm:$0xff]
      %v559 = vld [vmem:[#allocation2 + $0x8] sm:$0xf]
      %v562 = vcombine.high %v558, %v558
      %563 = vrot.lane.b32.xlu0 %v558, 15
      %v564 = vpop.permute.xlu0 %563
      %565 = vrot.lane.b32.xlu0 %v562, 15
      %v566 = vpop.permute.xlu0 %565
      %567 = vrot.lane.b32.xlu0 %v559, 15
      %v568 = vpop.permute.xlu0 %567
      %v569 = vsel %vm315, %v564, %v566
      %v570 = vsel %vm315, %v566, %v568
      %v573 = vsel %vm256, %v569, 0.0
      %v574 = vsel %vm257, %v570, 0.0
      %575 = vst [vmem:[#allocation3 + $0x10] sm:$0xf] %v573
      %576 = vst [vmem:[#allocation3 + $0x18] sm:$0xf] %v574
      %v577 = vld [vmem:[#allocation2] sm:$0xff]
      %v578 = vld [vmem:[#allocation2 + $0x8] sm:$0xf]
      %v581 = vcombine.high %v577, %v577
      %582 = vrot.lane.b32.xlu0 %v577, 1
      %v583 = vpop.permute.xlu0 %582
      %584 = vrot.lane.b32.xlu0 %v581, 1
      %v585 = vpop.permute.xlu0 %584
      %586 = vrot.lane.b32.xlu0 %v578, 1
      %v587 = vpop.permute.xlu0 %586
      %v588 = vsel %vm335, %v583, %v585
      %v589 = vsel %vm335, %v585, %v587
      %v592 = vsel %vm254, %v588, 0.0
      %v593 = vsel %vm255, %v589, 0.0
      %v596 = vrot.slane %v592, 4
      %v597 = vrot.slane %v593, 4
      %600 = vst [vmem:[#allocation3 + $0x10] sm:$0xf0] %v596
      %601 = vst [vmem:[#allocation3 + $0x18] sm:$0xf0] %v597
      %v602 = vld [vmem:[#allocation2 + $0x4] sm:$0xff]
      %v604 = vcombine.high %v602, %v602
      %606 = vst [vmem:[#allocation3 + $0x20] sm:$0xf] %v602
      %607 = vst [vmem:[#allocation3 + $0x28] sm:$0xf] %v604
      %v608 = vld [vmem:[#allocation2 + $0x4] sm:$0xff]
      %v609 = vld [vmem:[#allocation2 + $0xc] sm:$0xf]
      %v612 = vcombine.high %v608, %v608
      %613 = vrot.lane.b32.xlu0 %v608, 127
      %v614 = vpop.permute.xlu0 %613
      %615 = vrot.lane.b32.xlu0 %v612, 127
      %v616 = vpop.permute.xlu0 %615
      %617 = vrot.lane.b32.xlu0 %v609, 127
      %v618 = vpop.permute.xlu0 %617
      %v619 = vsel %vm367, %v614, %v616
      %v620 = vsel %vm367, %v616, %v618
      %v623 = vsel %vm256, %v619, 0.0
      %v624 = vsel %vm257, %v620, 0.0
      %v627 = vrot.slane %v623, 4
      %v628 = vrot.slane %v624, 4
      %631 = vst [vmem:[#allocation3 + $0x20] sm:$0xf0] %v627
      %632 = vst [vmem:[#allocation3 + $0x28] sm:$0xf0] %v628
      %v633 = vld [vmem:[#allocation2 + $0x4] sm:$0xff]
      %v634 = vld [vmem:[#allocation2 + $0xc] sm:$0xf]
      %v637 = vcombine.high %v633, %v633
      %638 = vrot.lane.b32.xlu0 %v633, 113
      %v639 = vpop.permute.xlu0 %638
      %640 = vrot.lane.b32.xlu0 %v637, 113
      %v641 = vpop.permute.xlu0 %640
      %642 = vrot.lane.b32.xlu0 %v634, 113
      %v643 = vpop.permute.xlu0 %642
      %v644 = vsel %vm393, %v639, %v641
      %v645 = vsel %vm393, %v641, %v643
      %v648 = vsel %vm254, %v644, 0.0
      %v649 = vsel %vm255, %v645, 0.0
      %650 = vst [vmem:[#allocation3 + $0x30] sm:$0xf] %v648
      %651 = vst [vmem:[#allocation3 + $0x38] sm:$0xf] %v649
      %v652 = vld [vmem:[#allocation2 + $0x4] sm:$0xff]
      %v653 = vld [vmem:[#allocation2 + $0xc] sm:$0xf]
      %v656 = vcombine.low %v652, %v652
      %v657 = vcombine.low %v653, %v653
      %658 = vrot.lane.b32.xlu0 %v656, 112
      %v659 = vpop.permute.xlu0 %658
      %660 = vrot.lane.b32.xlu0 %v652, 112
      %v661 = vpop.permute.xlu0 %660
      %662 = vrot.lane.b32.xlu0 %v657, 112
      %v663 = vpop.permute.xlu0 %662
      %v664 = vsel %vm414, %v659, %v661
      %v665 = vsel %vm414, %v661, %v663
      %668 = vst [vmem:[#allocation3 + $0x30] sm:$0xf0] %v664
      %669 = vst [vmem:[#allocation3 + $0x38] sm:$0xf0] %v665
      %v670 = vld [vmem:[#allocation2 + $0x4] sm:$0xff]
      %v671 = vld [vmem:[#allocation2 + $0xc] sm:$0xf]
      %v674 = vcombine.high %v670, %v670
      %675 = vrot.lane.b32.xlu0 %v670, 111
      %v676 = vpop.permute.xlu0 %675
      %677 = vrot.lane.b32.xlu0 %v674, 111
      %v678 = vpop.permute.xlu0 %677
      %679 = vrot.lane.b32.xlu0 %v671, 111
      %v680 = vpop.permute.xlu0 %679
      %v681 = vsel %vm432, %v676, %v678
      %v682 = vsel %vm432, %v678, %v680
      %v685 = vsel %vm256, %v681, 0.0
      %v686 = vsel %vm257, %v682, 0.0
      %687 = vst [vmem:[#allocation3 + $0x40] sm:$0xf] %v685
      %688 = vst [vmem:[#allocation3 + $0x48] sm:$0xf] %v686
      %v689 = vld [vmem:[#allocation3] sm:$0xff]
      %v690 = vld [vmem:[#allocation3 + $0x8] sm:$0xff]
      %v691 = vld [vmem:[#allocation3 + $0x10] sm:$0xff]
      %v692 = vld [vmem:[#allocation3 + $0x18] sm:$0xff]
      %v693 = vld [vmem:[#allocation3 + $0x20] sm:$0xff]
      %v694 = vld [vmem:[#allocation3 + $0x28] sm:$0xff]
      %v695 = vld [vmem:[#allocation3 + $0x30] sm:$0xff]
      %v696 = vld [vmem:[#allocation3 + $0x38] sm:$0xff]
      %v697 = vld [vmem:[#allocation3 + $0x40] sm:$0xf]
      %v698 = vld [vmem:[#allocation3 + $0x48] sm:$0xf]
      %v699 = vpack.c.bf16 %v691, %v689
      %v700 = vpack.c.bf16 %v692, %v690
      %v701 = vpack.c.bf16 %v695, %v693
      %v702 = vpack.c.bf16 %v696, %v694
      %v703 = vpack.c.bf16 %v697, %v697
      %v704 = vpack.c.bf16 %v698, %v698
      %706 = vset.pattern.permute.xlu0 0
      %707 = vperm.xlu0 %706, %v263
      %v708 = vpop.permute.xlu0 %707
      %v711 = vsel %vm462, %v261, 0
      %v714 = vsel %vm466, %v703, 0
      %v717 = vsel %vm466, %v704, 0
      %719 = vmatprep.subr.bf16.mxu0 %v700
      %720 = vmatpush1.bf16.msra.mxu0 %v699
      %721 = vmatprep.subr.bf16.mxu0 %v702
      %722 = vmatpush1.bf16.msra.mxu0 %v701
      %723 = vmatprep.subr.bf16.mxu0 %v717
      %724 = vmatpush1.bf16.msra.mxu0 %v714
      %725 = vmatprep.subr.bf16.mxu0 0
      %726 = vmatpush1.bf16.msra.mxu0 0
      %727 = vmatprep.subr.bf16.mxu0 0
      %728 = vmatpush1.bf16.msra.mxu0 0
      %729 = vmatprep.subr.bf16.mxu0 0
      %730 = vmatpush1.bf16.msra.mxu0 0
      %731 = vmatprep.subr.bf16.mxu0 0
      %732 = vmatpush1.bf16.msra.mxu0 0
      %733 = vmatprep.subr.bf16.mxu0 0
      %734 = vmatpush1.bf16.msra.mxu0 0
      %735 = vmatprep.subr.bf16.mxu0 0
      %736 = vmatpush1.bf16.msra.mxu0 0
      %737 = vmatprep.subr.bf16.mxu0 0
      %738 = vmatpush1.bf16.msra.mxu0 0
      %739 = vmatprep.subr.bf16.mxu0 0
      %740 = vmatpush1.bf16.msra.mxu0 0
      %741 = vmatprep.subr.bf16.mxu0 0
      %742 = vmatpush1.bf16.msra.mxu0 0
      %743 = vmatprep.subr.bf16.mxu0 0
      %744 = vmatpush1.bf16.msra.mxu0 0
      %745 = vmatprep.subr.bf16.mxu0 0
      %746 = vmatpush1.bf16.msra.mxu0 0
      %747 = vmatprep.subr.bf16.mxu0 0
      %748 = vmatpush1.bf16.msra.mxu0 0
      %749 = vmatprep.subr.bf16.mxu0 0
      %750 = vmatpush1.bf16.msra.mxu0 0
      %751 = vmatprep.mubr.bf16.mxu0 0
      %752 = vmatmul.mubr.bf16.gmra.mrb[0].mxu0 %v711
      %v753 = vpop.f32.mrb[0].mxu0
      %v754 = vadd.f32 %v708, %v753
      %v755 = vpop.f32.mrb[0].mxu0
      %v756 = vadd.f32 %v708, %v755
      %v757 = vpop.f32.mrb[0].mxu0
      %v758 = vpop.f32.mrb[0].mxu0
      %759 = vdwg.mxu0
      %v762 = vcombine.low %v754, %v756
      %v764 = vadd.f32 %v226, %v762
      %v765 = vmax.f32 %v764, 0.0
      %766 = vst [vmem:[%s224] sm:$0xff] %v765
      %p767 = scmp.lt.s32.totalorder %s16, 1
      %s768 = scalar_select %p767, %s16, 1
      %s769 = smul.addr %s768, 2
      %s770 = smul.addr %s769, 4
      %s771 = scalar_lea.vmem %s5, %s770
      // Predicated region
      $region41: #{unary_module_forward.1} parent=39 // pred_check
        %p772 = pneg %p144
      $region42: #{unary_module_forward.1} parent=39 // pred_check_branch
        %774 = sbr.rel (%p772) target = $region44
      $region43: #{unary_module_forward.1} parent=39 // pred_region
        _
      $region44: #{unary_module_forward.1} parent=39 // pred_fallthru
        _
    $region40: #{unary_module_forward.1} parent=5 // pred_fallthru
      _
    %p775 = scmp.le.s32.totalorder 2, %s11
    // Predicated region
    $region45: #{unary_module_forward.1} parent=5 // pred_check
      %p776 = pneg %p775
    $region46: #{unary_module_forward.1} parent=5 // pred_check_branch
      %778 = sbr.rel (%p776) target = $region48
    $region47: #{unary_module_forward.1} parent=5 // pred_region
      %s779 = ssub.s32 %s11, 2
      // Predicated region
      $region49: #{unary_module_forward.1} parent=47 // pred_check
        %p780 = pneg %p150
      $region50: #{unary_module_forward.1} parent=47 // pred_check_branch
        %782 = sbr.rel (%p780) target = $region52
      $region51: #{unary_module_forward.1} parent=47 // pred_region
        %p783 = scmp.lt.s32.totalorder %s17, 1
        %s784 = scalar_select %p783, %s17, 1
        %s785 = smul.addr %s784, 2
        %s786 = smul.addr %s785, 4
        %s787 = scalar_lea.vmem %s5, %s786
      $region52: #{unary_module_forward.1} parent=47 // pred_fallthru
        _
    $region48: #{unary_module_forward.1} parent=5 // pred_fallthru
      _
  $region6: #{unary_module_forward.1} parent=0 // loop_footer
    %s15 = sadd.s32 1, %s11
  $region7: #{unary_module_forward.1} parent=0 // loop_footer_branch
    %10 = sbr.rel target = $region3
  $region8: #{unary_module_forward.1} parent=0 // loop_exit
    _

</llo_original>
